<compile_context>
chip_gen: v5e
topology: v5e:2x2
jax: 0.10.0
libtpu: 0.0.40
codegen_flags: <defaults>
</compile_context>

<pallas_src>
import math
import functools

import jax
import jax.numpy as jnp
from jax import lax
from jax.experimental import pallas as pl
from jax.experimental.pallas import tpu as pltpu


def _round_up(x, m):
    return (x + m - 1) // m * m


def _arc_margin_kernel(x_ref, w_ref, w_inv_ref, label_ref, out_ref, *,
                       s, cos_m, sin_m, th, mm, easy_margin, ls_eps,
                       out_features, tile_c):
    # Raw (un-normalized) operands go straight to the MXU; normalization is
    # applied afterwards as cheap per-row / per-column scales on the small
    # (TM, TN) cosine tile.
    x = x_ref[...]                                   # (TM, D), native dtype
    w = w_ref[...]                                   # (TN, D), native dtype

    # cosine_raw[b, c] = sum_d x[b, d] * w[c, d] — contract the shared last
    # dim directly (no weight-tile transpose), accumulate in f32 on the MXU.
    raw = lax.dot_general(
        x, w,
        dimension_numbers=(((1,), (1,)), ((), ())),
        preferred_element_type=jnp.float32)          # (TM, TN) f32

    # Row-wise 1/max(||x||, 1e-12) via EUP rsqrt (x tile is resident across
    # the class axis, so this is a tiny recompute per tile).
    xf = x.astype(jnp.float32)
    inv_x = lax.rsqrt(jnp.maximum(jnp.sum(xf * xf, axis=1, keepdims=True),
                                  1e-24))            # (TM, 1)
    inv_w = w_inv_ref[...]                           # (1, TN) f32, precomputed

    cosine = raw * inv_x * inv_w                     # (TM, TN) f32

    # Clamp 1 - cos^2 to [0, 1]: finite precision can push |cos| past 1 and
    # otherwise produce NaNs through the sqrt.
    sine = jnp.sqrt(jnp.clip(1.0 - cosine * cosine, 0.0, 1.0))
    phi = cosine * cos_m - sine * sin_m
    if easy_margin:
        phi = jnp.where(cosine > 0.0, phi, cosine)
    else:
        phi = jnp.where(cosine > th, phi, cosine - mm)

    # One-hot via iota compare, offset by this tile's starting class index.
    col0 = pl.program_id(1) * tile_c
    col_ids = col0 + lax.broadcasted_iota(jnp.int32, cosine.shape, 1)
    one_hot = (col_ids == label_ref[...]).astype(jnp.float32)   # (TM, TN)
    if ls_eps > 0:
        one_hot = (1.0 - ls_eps) * one_hot + ls_eps / out_features

    out_ref[...] = ((one_hot * phi + (1.0 - one_hot) * cosine) * s
                    ).astype(out_ref.dtype)


def arc_margin_product(x, weight, label, *, s, m, easy_margin, ls_eps,
                       block_b=128, block_c=512):
    """x: (B, in_features), weight: (out_features, in_features), label: (B,)."""
    B, D = x.shape
    C, Dw = weight.shape
    assert D == Dw

    # Lane-dense class tiles (multiple of 128); sublane-aligned batch tiles.
    TN = min(block_c, _round_up(C, 128))
    TN = _round_up(TN, 128)
    C_pad = _round_up(C, TN)
    TM = min(block_b, _round_up(B, 8))
    TM = _round_up(TM, 8)
    B_pad = _round_up(B, TM)

    # Pad once in the wrapper; padded weight rows are zero -> cosine 0 there,
    # padded labels are -1 -> never match a column id.  Sliced off at the end.
    x_p = jnp.pad(x, ((0, B_pad - B), (0, 0)))
    w_p = jnp.pad(weight, ((0, C_pad - C), (0, 0)))
    label_p = jnp.pad(label.reshape(B, 1).astype(jnp.int32),
                      ((0, B_pad - B), (0, 0)), constant_values=-1)

    # Per-class 1/||w_c|| precomputed once, shipped lane-dense as (1, C_pad).
    w_norm = jnp.linalg.norm(weight.astype(jnp.float32), axis=1)
    w_inv = 1.0 / jnp.maximum(w_norm, 1e-12)
    w_inv_p = jnp.pad(w_inv, (0, C_pad - C)).reshape(1, C_pad)

    kernel = functools.partial(
        _arc_margin_kernel,
        s=float(s),
        cos_m=math.cos(m),
        sin_m=math.sin(m),
        th=math.cos(math.pi - m),
        mm=math.sin(math.pi - m) * m,
        easy_margin=bool(easy_margin),
        ls_eps=float(ls_eps),
        out_features=C,
        tile_c=TN,
    )

    grid = (B_pad // TM, C_pad // TN)
    out = pl.pallas_call(
        kernel,
        out_shape=jax.ShapeDtypeStruct((B_pad, C_pad), jnp.float32),
        grid=grid,
        in_specs=[
            pl.BlockSpec((TM, D), lambda i, j: (i, 0)),    # x: resident over C
            pl.BlockSpec((TN, D), lambda i, j: (j, 0)),    # W: streamed over C
            pl.BlockSpec((1, TN), lambda i, j: (0, j)),    # 1/||w|| row tile
            pl.BlockSpec((TM, 1), lambda i, j: (i, 0)),    # labels
        ],
        out_specs=pl.BlockSpec((TM, TN), lambda i, j: (i, j)),
        compiler_params=pltpu.CompilerParams(
            dimension_semantics=("parallel", "parallel"),
            vmem_limit_bytes=32 * 1024 * 1024,
        ),
    )(x_p, w_p, w_inv_p, label_p)

    return out[:B, :C]


def _reference(x, weight, label, *, s, m, easy_margin, ls_eps):
    """Plain-JAX reference mirroring the PyTorch forward."""
    cos_m, sin_m = math.cos(m), math.sin(m)
    th, mm = math.cos(math.pi - m), math.sin(math.pi - m) * m
    x_n = x / jnp.maximum(jnp.linalg.norm(x, axis=-1, keepdims=True), 1e-12)
    w_n = weight / jnp.maximum(jnp.linalg.norm(weight, axis=-1, keepdims=True), 1e-12)
    cosine = (x_n @ w_n.T).astype(jnp.float32)
    sine = jnp.sqrt(1.0 - cosine ** 2)
    phi = cosine * cos_m - sine * sin_m
    phi = (jnp.where(cosine > 0, phi, cosine) if easy_margin
           else jnp.where(cosine > th, phi, cosine - mm))
    one_hot = jax.nn.one_hot(label, weight.shape[0], dtype=jnp.float32)
    if ls_eps > 0:
        one_hot = (1 - ls_eps) * one_hot + ls_eps / weight.shape[0]
    return (one_hot * phi + (1.0 - one_hot) * cosine) * s


def _run_case(key, B, D, C, *, s, m, easy_margin, ls_eps, block_b, block_c):
    k_x, k_w, k_l = jax.random.split(key, 3)
    x = jax.random.normal(k_x, (B, D), dtype=jnp.float32)
    label = jax.random.randint(k_l, (B,), 0, C, dtype=jnp.int32)
    # Deterministic xavier_uniform_-style init for weight (C, D).
    limit = math.sqrt(6.0 / (D + C))
    weight = jax.random.uniform(k_w, (C, D), dtype=jnp.float32,
                                minval=-limit, maxval=limit)

    out = arc_margin_product(x, weight, label, s=s, m=m,
                             easy_margin=easy_margin, ls_eps=ls_eps,
                             block_b=block_b, block_c=block_c)
    out = jax.block_until_ready(out)
    ref = _reference(x, weight, label, s=s, m=m,
                     easy_margin=easy_margin, ls_eps=ls_eps)
    assert out.shape == (B, C) and out.dtype == jnp.float32
    assert jnp.allclose(out, ref, atol=1e-4, rtol=1e-4), "mismatch vs reference"


if __name__ == "__main__":
    key = jax.random.PRNGKey(0)
    k1, k2 = jax.random.split(key)

    # Case 1: same toy shapes as the module demo (single (1,1)-grid after
    # padding C up to a lane-dense 128 tile).
    _run_case(k1, B=8, D=32, C=16,
              s=30.0, m=0.5, easy_margin=False, ls_eps=0.1,
              block_b=128, block_c=512)

    # Case 2: exercises the multi-tile grid path (batch and class tiling,
    # offset one-hot iota, padding/slicing) and the easy_margin branch.
    _run_case(k2, B=16, D=64, C=300,
              s=16.0, m=0.3, easy_margin=True, ls_eps=0.0,
              block_b=8, block_c=128)

    print("KERNEL_OK")
</pallas_src>

<mosaic_0001>
module attributes {stable_mosaic.version = 11 : i64} {
  func.func @_arc_margin_kernel(%arg0: i32, %arg1: i32, %arg2: memref<8x32xf32, #tpu.memory_space<vmem>>, %arg3: memref<128x32xf32, #tpu.memory_space<vmem>>, %arg4: memref<1x128xf32, #tpu.memory_space<vmem>>, %arg5: memref<8x1xi32, #tpu.memory_space<vmem>>, %arg6: memref<8x128xf32, #tpu.memory_space<vmem>>) attributes {dimension_semantics = [#tpu.dimension_semantics<parallel>, #tpu.dimension_semantics<parallel>], iteration_bounds = array<i64: 1, 1>, scalar_prefetch = 0 : i64, scratch_operands = 0 : i64, tpu.core_type = #tpu.core_type<tc>, window_params = [{transform_indices = @transform_0, window_bounds = array<i64: 8, 32>}, {transform_indices = @transform_1, window_bounds = array<i64: 128, 32>}, {transform_indices = @transform_2, window_bounds = array<i64: 1, 128>}, {transform_indices = @transform_3, window_bounds = array<i64: 8, 1>}, {transform_indices = @transform_4, window_bounds = array<i64: 8, 128>}]} {
    %c0 = arith.constant 0 : index
    %c0_0 = arith.constant 0 : index
    %0 = vector.load %arg2[%c0, %c0_0] : memref<8x32xf32, #tpu.memory_space<vmem>>, vector<8x32xf32>
    %c0_1 = arith.constant 0 : index
    %c0_2 = arith.constant 0 : index
    %1 = vector.load %arg3[%c0_1, %c0_2] : memref<128x32xf32, #tpu.memory_space<vmem>>, vector<128x32xf32>
    %cst = arith.constant dense<0.000000e+00> : vector<8x128xf32>
    %2 = tpu.matmul %0, %1, %cst {dimension_numbers = #tpu.dot_dimension_numbers<[1], [1], [0], [0], [0, 0, 1, 0], [], []>} : vector<8x32xf32>, vector<128x32xf32>, vector<8x128xf32> -> vector<8x128xf32>
    %3 = arith.mulf %0, %0 : vector<8x32xf32>
    %cst_3 = arith.constant dense<0.000000e+00> : vector<8xf32>
    %4 = vector.multi_reduction <add>, %3, %cst_3 [1] : vector<8x32xf32> to vector<8xf32>
    %5 = vector.shape_cast %4 : vector<8xf32> to vector<8x1xf32>
    %cst_4 = arith.constant 1.000000e-24 : f32
    %6 = vector.broadcast %cst_4 : f32 to vector<8x1xf32>
    %7 = arith.maximumf %5, %6 : vector<8x1xf32>
    %8 = math.rsqrt %7 : vector<8x1xf32>
    %c0_5 = arith.constant 0 : index
    %c0_6 = arith.constant 0 : index
    %9 = vector.load %arg4[%c0_5, %c0_6] : memref<1x128xf32, #tpu.memory_space<vmem>>, vector<1x128xf32>
    %10 = vector.broadcast %8 : vector<8x1xf32> to vector<8x128xf32>
    %11 = arith.mulf %2, %10 : vector<8x128xf32>
    %12 = vector.broadcast %9 : vector<1x128xf32> to vector<8x128xf32>
    %13 = arith.mulf %11, %12 : vector<8x128xf32>
    %14 = arith.mulf %13, %13 : vector<8x128xf32>
    %cst_7 = arith.constant 1.000000e+00 : f32
    %15 = vector.broadcast %cst_7 : f32 to vector<8x128xf32>
    %16 = arith.subf %15, %14 : vector<8x128xf32>
    %cst_8 = arith.constant 0.000000e+00 : f32
    %cst_9 = arith.constant 1.000000e+00 : f32
    %17 = vector.broadcast %cst_8 : f32 to vector<8x128xf32>
    %18 = arith.maximumf %17, %16 : vector<8x128xf32>
    %19 = vector.broadcast %cst_9 : f32 to vector<8x128xf32>
    %20 = arith.minimumf %19, %18 : vector<8x128xf32>
    %21 = math.sqrt %20 : vector<8x128xf32>
    %cst_10 = arith.constant 0.87758255 : f32
    %22 = vector.broadcast %cst_10 : f32 to vector<8x128xf32>
    %23 = arith.mulf %13, %22 : vector<8x128xf32>
    %cst_11 = arith.constant 0.47942555 : f32
    %24 = vector.broadcast %cst_11 : f32 to vector<8x128xf32>
    %25 = arith.mulf %21, %24 : vector<8x128xf32>
    %26 = arith.subf %23, %25 : vector<8x128xf32>
    %cst_12 = arith.constant -0.87758255 : f32
    %27 = vector.broadcast %cst_12 : f32 to vector<8x128xf32>
    %28 = arith.cmpf ogt, %13, %27 : vector<8x128xf32>
    %cst_13 = arith.constant 0.239712775 : f32
    %29 = vector.broadcast %cst_13 : f32 to vector<8x128xf32>
    %30 = arith.subf %13, %29 : vector<8x128xf32>
    %31 = arith.select %28, %26, %30 : vector<8x128xi1>, vector<8x128xf32>
    %c128_i32 = arith.constant 128 : i32
    %32 = arith.muli %arg1, %c128_i32 : i32
    %33 = tpu.iota {dimensions = array<i32: 1>} : vector<8x128xi32>
    %34 = vector.broadcast %32 : i32 to vector<8x128xi32>
    %35 = arith.addi %34, %33 : vector<8x128xi32>
    %c0_14 = arith.constant 0 : index
    %c0_15 = arith.constant 0 : index
    %36 = vector.load %arg5[%c0_14, %c0_15] : memref<8x1xi32, #tpu.memory_space<vmem>>, vector<8x1xi32>
    %37 = vector.broadcast %36 : vector<8x1xi32> to vector<8x128xi32>
    %38 = arith.cmpi eq, %35, %37 : vector<8x128xi32>
    %39 = arith.extui %38 : vector<8x128xi1> to vector<8x128xi32>
    %40 = arith.sitofp %39 : vector<8x128xi32> to vector<8x128xf32>
    %cst_16 = arith.constant 0.899999976 : f32
    %41 = vector.broadcast %cst_16 : f32 to vector<8x128xf32>
    %42 = arith.mulf %41, %40 : vector<8x128xf32>
    %cst_17 = arith.constant 6.250000e-03 : f32
    %43 = vector.broadcast %cst_17 : f32 to vector<8x128xf32>
    %44 = arith.addf %42, %43 : vector<8x128xf32>
    %45 = arith.mulf %44, %31 : vector<8x128xf32>
    %cst_18 = arith.constant 1.000000e+00 : f32
    %46 = vector.broadcast %cst_18 : f32 to vector<8x128xf32>
    %47 = arith.subf %46, %44 : vector<8x128xf32>
    %48 = arith.mulf %47, %13 : vector<8x128xf32>
    %49 = arith.addf %45, %48 : vector<8x128xf32>
    %cst_19 = arith.constant 3.000000e+01 : f32
    %50 = vector.broadcast %cst_19 : f32 to vector<8x128xf32>
    %51 = arith.mulf %49, %50 : vector<8x128xf32>
    %c0_20 = arith.constant 0 : index
    %c0_21 = arith.constant 0 : index
    %52 = vector.load %arg6[%c0_20, %c0_21] : memref<8x128xf32, #tpu.memory_space<vmem>>, vector<8x128xf32>
    tpu.vector_store %arg6[%c0_20, %c0_21], %51 {strides = array<i32>} : memref<8x128xf32, #tpu.memory_space<vmem>>, vector<8x128xf32>,
    return
  }
  func.func @transform_0(%arg0: i32, %arg1: i32) -> (i32, i32) {
    %c0_i32 = arith.constant 0 : i32
    %c0_i32_0 = arith.constant 0 : i32
    return %arg0, %c0_i32 : i32, i32
  }
  func.func @transform_1(%arg0: i32, %arg1: i32) -> (i32, i32) {
    %c0_i32 = arith.constant 0 : i32
    %c0_i32_0 = arith.constant 0 : i32
    return %arg1, %c0_i32 : i32, i32
  }
  func.func @transform_2(%arg0: i32, %arg1: i32) -> (i32, i32) {
    %c0_i32 = arith.constant 0 : i32
    %c0_i32_0 = arith.constant 0 : i32
    return %c0_i32, %arg1 : i32, i32
  }
  func.func @transform_3(%arg0: i32, %arg1: i32) -> (i32, i32) {
    %c0_i32 = arith.constant 0 : i32
    %c0_i32_0 = arith.constant 0 : i32
    return %arg0, %c0_i32 : i32, i32
  }
  func.func @transform_4(%arg0: i32, %arg1: i32) -> (i32, i32) {
    %c0_i32 = arith.constant 0 : i32
    return %arg0, %arg1 : i32, i32
  }
}

</mosaic_0001>

<llo_original>
// kernel: tpu_custom_call.1
$region0: #{tpu_custom_call.1}
  #allocation0 [shape = 'u32[]', space=smem, size = 0x4, offset = 0x4, fixed_abs, tag = 'smem constant byte address 0x4 - core index']
  #allocation1 [shape = 'u32[72,128]{1,0:T(1,128)}', space=vmem, size = 0x9000, scoped, tag = 'internal scratch']
  %s0 = inlined_call_operand.vmem [shape: f32[8,32], index: 0, kind: input, shape index: {}]
  %s1 = inlined_call_operand.vmem [shape: f32[128,32], index: 1, kind: input, shape index: {}]
  %s2 = inlined_call_operand.vmem [shape: f32[1,128], index: 2, kind: input, shape index: {}]
  %s3 = inlined_call_operand.vmem [shape: s32[8,1], index: 3, kind: input, shape index: {}]
  %s4 = inlined_call_operand.hbm [shape: f32[8,128], index: 4, kind: output, shape index: {}]
  %s5 = sld [smem:[#allocation0]]
  $region26: #{tpu_custom_call.1} parent=0
    _
  %s7 = ssub.s32 1, %s5
  %s8 = scalar_select 0, %s7, %s5
  $region1: #{tpu_custom_call.1} parent=0
    #allocation2 [shape = 'u8[4096]{0}', space=vmem, size = 0x1000, scoped, tag = 'output window, operand 0, single buffered']
    #allocation3 [shape = 's32[1]{0}', space=sflag, size = 0x4, scoped, tag = 'scoped memory for tpu_custom_call.1']
    %9 = vsyncpa [#allocation3], 0
    // Predicated region
    $region2: #{tpu_custom_call.1} parent=1 // pred_check
      _
    $region3: #{tpu_custom_call.1} parent=1 // pred_check_branch
      %11 = sbr.rel (0) target = $region5
    $region4: #{tpu_custom_call.1} parent=1 // pred_region
      _
    $region5: #{tpu_custom_call.1} parent=1 // pred_fallthru
      _
    // Predicated region
    $region6: #{tpu_custom_call.1} parent=1 // pred_check
      _
    $region7: #{tpu_custom_call.1} parent=1 // pred_check_branch
      %13 = sbr.rel (0) target = $region9
    $region8: #{tpu_custom_call.1} parent=1 // pred_region
      _
    $region9: #{tpu_custom_call.1} parent=1 // pred_fallthru
      _
    // Predicated region
    $region10: #{tpu_custom_call.1} parent=1 // pred_check
      _
    $region11: #{tpu_custom_call.1} parent=1 // pred_check_branch
      %15 = sbr.rel (0) target = $region13
    $region12: #{tpu_custom_call.1} parent=1 // pred_region
      _
    $region13: #{tpu_custom_call.1} parent=1 // pred_fallthru
      _
    // Predicated region
    $region14: #{tpu_custom_call.1} parent=1 // pred_check
      _
    $region15: #{tpu_custom_call.1} parent=1 // pred_check_branch
      %17 = sbr.rel (0) target = $region17
    $region16: #{tpu_custom_call.1} parent=1 // pred_region
      _
    $region17: #{tpu_custom_call.1} parent=1 // pred_fallthru
      _
    %v18 = vld [vmem:[%s0] sm:$0xff]
    %v19 = vld [vmem:[%s1] sm:$0xff]
    %v20 = vld [vmem:[%s1 + $0x8] sm:$0xff]
    %v21 = vld [vmem:[%s1 + $0x10] sm:$0xff]
    %v22 = vld [vmem:[%s1 + $0x18] sm:$0xff]
    %v23 = vld [vmem:[%s1 + $0x20] sm:$0xff]
    %v24 = vld [vmem:[%s1 + $0x28] sm:$0xff]
    %v25 = vld [vmem:[%s1 + $0x30] sm:$0xff]
    %v26 = vld [vmem:[%s1 + $0x38] sm:$0xff]
    %v27 = vld [vmem:[%s1 + $0x40] sm:$0xff]
    %v28 = vld [vmem:[%s1 + $0x48] sm:$0xff]
    %v29 = vld [vmem:[%s1 + $0x50] sm:$0xff]
    %v30 = vld [vmem:[%s1 + $0x58] sm:$0xff]
    %v31 = vld [vmem:[%s1 + $0x60] sm:$0xff]
    %v32 = vld [vmem:[%s1 + $0x68] sm:$0xff]
    %v33 = vld [vmem:[%s1 + $0x70] sm:$0xff]
    %v34 = vld [vmem:[%s1 + $0x78] sm:$0xff]
    %vm35 = vcmask 261120
    %v37 = vsel %vm35, %v18, 0
    %v40 = vsel %vm35, %v19, 0
    %v43 = vsel %vm35, %v20, 0
    %v46 = vsel %vm35, %v21, 0
    %v49 = vsel %vm35, %v22, 0
    %v52 = vsel %vm35, %v23, 0
    %v55 = vsel %vm35, %v24, 0
    %v58 = vsel %vm35, %v25, 0
    %v61 = vsel %vm35, %v26, 0
    %v64 = vsel %vm35, %v27, 0
    %v67 = vsel %vm35, %v28, 0
    %v70 = vsel %vm35, %v29, 0
    %v73 = vsel %vm35, %v30, 0
    %v76 = vsel %vm35, %v31, 0
    %v79 = vsel %vm35, %v32, 0
    %v82 = vsel %vm35, %v33, 0
    %v85 = vsel %vm35, %v34, 0
    %87 = vmatpush.xpose.msra.mxu0 %v85
    %88 = vmatpush.xpose.msra.mxu0 %v82
    %89 = vmatpush.xpose.msra.mxu0 %v79
    %90 = vmatpush.xpose.msra.mxu0 %v76
    %91 = vmatpush.xpose.msra.mxu0 %v73
    %92 = vmatpush.xpose.msra.mxu0 %v70
    %93 = vmatpush.xpose.msra.mxu0 %v67
    %94 = vmatpush.xpose.msra.mxu0 %v64
    %95 = vmatpush.xpose.msra.mxu0 %v61
    %96 = vmatpush.xpose.msra.mxu0 %v58
    %97 = vmatpush.xpose.msra.mxu0 %v55
    %98 = vmatpush.xpose.msra.mxu0 %v52
    %99 = vmatpush.xpose.msra.mxu0 %v49
    %100 = vmatpush.xpose.msra.mxu0 %v46
    %101 = vmatpush.xpose.msra.mxu0 %v43
    %102 = vmatpush.xpose.msra.mxu0 %v40
    %103 = vmatmul.f32.gmra.mxu0 %v37
    %v104 = vpop.f32.mrf.mxu0
    %v105 = vadd.f32 0.0, %v104
    %106 = vdwg.mxu0
    %v107 = vmul.f32 %v18, %v18
    %v108 = vsel %vm35, %v107, 0.0
    %109 = vadd.xlane.f32.xlu0 %v108
    %v110 = vpop.xlane.xlu0 %109
    %v111 = vmax.f32 %v110, 1e-24
    %v112 = vrsqrt.pop %v111
    %v113 = vmul.f32 %v112, %v111
    %v114 = vmul.f32 %v113, %v112
    %v115 = vmul.f32 0.5, %v114
    %v116 = vsub.f32 1.5, %v115
    %v117 = vmul.f32 %v112, %v116
    %vm118 = vweird.f32 %v111
    %vm119 = vweird.f32 %v112
    %vm120 = vmor %vm118, %vm119
    %v121 = vsel %vm120, %v112, %v117
    %v122 = vld [vmem:[%s2] sm:$0x1]
    %v123 = vmul.f32 %v105, %v121
    %v125 = vperm.slane %v122, 0
    %v127 = vmul.f32 %v123, %v125
    %v128 = vmul.f32 %v127, %v127
    %v129 = vsub.f32 1.0, %v128
    %v130 = vmax.f32 %v129, 0.0
    %v131 = vmin.f32 %v130, 1.0
    %v132 = vrsqrt.pop %v131
    %v133 = vmul.f32 %v132, %v131
    %v134 = vmul.f32 %v133, %v132
    %v135 = vmul.f32 0.5, %v134
    %v136 = vsub.f32 1.5, %v135
    %v137 = vmul.f32 %v132, %v136
    %v138 = vmul.f32 %v131, %v137
    %vm139 = vcmp.eq.f32.partialorder %v131, inf
    %v140 = vsel %vm139, %v131, %v138
    %vm141 = vcmp.eq.f32.partialorder %v131, 0.0
    %v142 = vand.u32 %v131, 2147483648
    %v143 = vsel %vm141, %v142, %v140
    %v144 = vmul.f32 %v127, 0.87758255
    %v145 = vmul.f32 %v143, 0.47942555
    %v146 = vsub.f32 %v144, %v145
    %vm147 = vcmp.gt.f32.partialorder %v127, -0.87758255
    %v148 = vsub.f32 %v127, 0.23971277
    %v149 = vsel %vm147, %v146, %v148
    %s150 = smul.u32 0, 128
    %v151 = vlaneseq
    %v152 = vand.u32 %v151, 127
    %v153 = vstv %s150
    %v154 = vadd.s32 %v153, %v152
    %v155 = vld [vmem:[%s3] sm:$0xff]
    %156 = vset.pattern.permute.xlu0 0
    %157 = vperm.xlu0 %156, %v155
    %v158 = vpop.permute.xlu0 %157
    %vm159 = vcmp.eq.s32.totalorder %v154, %v158
    %v160 = vsel %vm159, 1, 0
    %v161 = vcvt.s32.f32 %v160
    %v162 = vmul.f32 %v161, 0.9
    %v163 = vadd.f32 %v162, 0.00625
    %v164 = vmul.f32 %v163, %v149
    %v165 = vsub.f32 1.0, %v163
    %v166 = vmul.f32 %v165, %v127
    %v167 = vadd.f32 %v164, %v166
    %v168 = vmul.f32 %v167, 30.0
    %169 = vst [vmem:[#allocation2] sm:$0xff] %v168
    // Predicated region
    $region18: #{tpu_custom_call.1} parent=1 // pred_check
      _
    $region19: #{tpu_custom_call.1} parent=1 // pred_check_branch
      %171 = sbr.rel (0) target = $region21
    $region20: #{tpu_custom_call.1} parent=1 // pred_region
      %173 = vsyncadd [#allocation3], 0
      %s175 = sshll.u32 [#allocation2], 4
      %s176 = int_to_ptr.vmem [resolvable:$true] %s175
      %s177 = sshll.u32 %s4, 4
      %s178 = int_to_ptr.hbm [resolvable:$true] %s177
      %180 = dma.vmem_to_hbm [thread:$0]  %s176, 128, %s178, [#allocation3]
    $region21: #{tpu_custom_call.1} parent=1 // pred_fallthru
      _
    // Predicated region
    $region22: #{tpu_custom_call.1} parent=1 // pred_check
      _
    $region23: #{tpu_custom_call.1} parent=1 // pred_check_branch
      %182 = sbr.rel (0) target = $region25
    $region24: #{tpu_custom_call.1} parent=1 // pred_region
      %184 = dma.done [#allocation3], 128
    $region25: #{tpu_custom_call.1} parent=1 // pred_fallthru
      _
    %185 = vsyncpa [#allocation3], 1

</llo_original>
